<compile_context>
chip_gen: v7x
topology: tpu7x:2x2x1
jax: 0.10.0
libtpu: 0.0.40
codegen_flags: <defaults>
</compile_context>

<pallas_src>
import functools
import math

import jax
import jax.numpy as jnp
import numpy as np
from jax.experimental import pallas as pl
from jax.experimental.pallas import tpu as pltpu


def _mha_mq_kernel(v_ref, wq_ref, bq_ref, e_ref, out_ref, attn_ref, *,
                   n_head, d_in, b_tile, seq_len, compute_dtype):
    """One grid step == B_TILE batch elements.

    Block shapes seen by the kernel:
      v_ref    : (b_tile, seq_len, d_in)
      wq_ref   : (d_in, n_head)        folded query/key projection (wrapper)
      bq_ref   : (1, n_head)           folded bias (wrapper)
      e_ref    : (n_head, d_in)        0/1 head->channel expansion (wrapper)
      out_ref  : (1, b_tile, d_in)     per-head outputs packed channel-major
      attn_ref : (1, n_head, b_tile*seq_len)
    """
    rows = b_tile * seq_len

    v_f32 = v_ref[...].reshape(rows, d_in)            # (R, d_in)  flat tokens
    v_mx = v_f32.astype(compute_dtype)

    # (1) All heads' scores for ALL tokens of the block in ONE MXU matmul
    #     (the fc1_k projection and the per-head query dot were folded into
    #     Wq/bq in the wrapper; 1/sqrt(d_k) is folded in too).
    scores = jnp.dot(v_mx, wq_ref[...],
                     preferred_element_type=jnp.float32) + bq_ref[...]   # (R, H)

    # (2) Numerically-stable softmax over the sequence axis, segmented per
    #     batch element.  Exact division (approx reciprocal broke 1e-3 parity).
    s3 = scores.reshape(b_tile, seq_len, n_head)
    m = jnp.max(s3, axis=1, keepdims=True)
    e = jnp.exp(s3 - m)
    attn3 = e / jnp.sum(e, axis=1, keepdims=True)                         # (BT, S, H)
    attn_flat = attn3.reshape(rows, n_head)                               # (R, H)

    # (3) attn output: one tiny XLU transpose so the store is lane-dense over
    #     the b_tile*seq_len axis (single slab store).
    attn_ref[0] = attn_flat.T.astype(attn_ref.dtype)                      # (H, R)

    # (4) Per-head attn @ V: expand attn to channel-aligned form with the 0/1
    #     matrix E (replaces the old in-kernel iota/where/masked-reduce), then
    #     an elementwise multiply with v and a segmented sublane reduce over
    #     seq.  out[b, h*dh+j] = sum_s attn[b,s,h] * v[b,s,h*dh+j].
    attn_exp = jnp.dot(attn_flat.astype(compute_dtype), e_ref[...],
                       preferred_element_type=jnp.float32)                # (R, d_in)
    out_bt = jnp.sum((attn_exp * v_f32).reshape(b_tile, seq_len, d_in),
                     axis=1)                                              # (BT, d_in)
    out_ref[0] = out_bt.astype(out_ref.dtype)                             # one slab store


def multi_head_attention_mq(q, k, v, params, *, n_head, d_k,
                            b_tile=None, compute_dtype=jnp.float32):
    """Pallas implementation of MultiHeadAttention_MQ.forward (inference)."""
    del k  # reference forward never uses `k`; `q` is only used for its shape
    sz_b, seq_len, d_in = q.shape
    assert v.shape == (sz_b, seq_len, d_in)
    assert d_in % n_head == 0
    dh = d_in // n_head
    inv_temp = 1.0 / math.sqrt(float(d_k))

    # --- batch folding -----------------------------------------------------
    if b_tile is None:
        # Keep >= 2 "parallel" grid steps when possible (v7x has 2 TCs that
        # split a parallel axis), fold the rest of the batch into each step,
        # and cap the v block at ~1 MiB so it fits comfortably in scoped VMEM
        # on all generations (v7x: 64 MiB physical / 32 MiB default scoped).
        cap = max(1, (1 << 20) // max(1, seq_len * d_in * 4))
        b_tile = max(1, min(pl.cdiv(sz_b, 2), cap))
    num_blocks = pl.cdiv(sz_b, b_tile)
    b_pad = num_blocks * b_tile
    v_in = jnp.pad(v, ((0, b_pad - sz_b), (0, 0), (0, 0))) if b_pad != sz_b else v

    # --- one-time parameter folding (wrapper-side, O(d_in*H*d_k) work) ------
    Q = params["Q"]                          # (n_head, d_k)
    Wk = params["Wk"]                        # (d_in, n_head*d_k)  (= torch weight.T)
    bk = params["bk"]                        # (n_head*d_k,)

    # Block-diagonal Q: q_bd[h*d_k + d, h'] = Q[h, d] * (h == h')
    q_bd = (Q[:, :, None] * jnp.eye(n_head, dtype=Q.dtype)[:, None, :]
            ).reshape(n_head * d_k, n_head)
    # scores = ((v @ Wk + bk) @ q_bd) / temp == v @ Wq + bq
    wq = (Wk @ q_bd) * inv_temp                          # (d_in, n_head)
    bq = ((bk @ q_bd) * inv_temp).reshape(1, n_head)     # (1, n_head)
    # Head -> channel expansion: E[h, c] = 1 iff c // dh == h
    e_mat = jnp.repeat(jnp.eye(n_head, dtype=jnp.float32), dh, axis=1)   # (H, d_in)

    wq = wq.astype(compute_dtype)
    e_mat = e_mat.astype(compute_dtype)

    kernel = functools.partial(_mha_mq_kernel, n_head=n_head, d_in=d_in,
                               b_tile=b_tile, seq_len=seq_len,
                               compute_dtype=compute_dtype)

    out_raw, attn_raw = pl.pallas_call(
        kernel,
        out_shape=(
            jax.ShapeDtypeStruct((num_blocks, b_tile, d_in), jnp.float32),
            jax.ShapeDtypeStruct((num_blocks, n_head, b_tile * seq_len), jnp.float32),
        ),
        grid=(num_blocks,),
        in_specs=[
            pl.BlockSpec((b_tile, seq_len, d_in), lambda i: (i, 0, 0)),   # v block
            pl.BlockSpec((d_in, n_head), lambda i: (0, 0)),               # Wq (folded)
            pl.BlockSpec((1, n_head), lambda i: (0, 0)),                  # bq (folded)
            pl.BlockSpec((n_head, d_in), lambda i: (0, 0)),               # E
        ],
        out_specs=(
            pl.BlockSpec((1, b_tile, d_in), lambda i: (i, 0, 0)),
            pl.BlockSpec((1, n_head, b_tile * seq_len), lambda i: (i, 0, 0)),
        ),
        compiler_params=pltpu.CompilerParams(
            dimension_semantics=("parallel",)),          # v7x: 2 TCs split the blocks
    )(v_in, wq, bq, e_mat)

    # Layout plumbing (cheap XLA reshuffles outside the kernel) to match the
    # torch .view(n_head, sz_b, ...) ordering.
    output = out_raw.reshape(b_pad, n_head, dh)[:sz_b]
    output = jnp.transpose(output, (1, 0, 2))                               # (H, B, dh)
    attn = attn_raw.reshape(num_blocks, n_head, b_tile, seq_len)
    attn = jnp.transpose(attn, (1, 0, 2, 3)).reshape(n_head, b_pad, seq_len)[:, :sz_b]
    return output, attn


def _reference_forward(q, k, v, params, *, n_head, d_k):
    """Pure-JAX transcription of the PyTorch forward (eval mode) for checking."""
    del k
    sz_b, seq_len, d_in = q.shape
    Q, Wk, bk = params["Q"], params["Wk"], params["bk"]
    qq = jnp.reshape(jnp.stack([Q] * sz_b, axis=1), (-1, d_k))          # (H*B, d_k)
    kk = (v @ Wk + bk).reshape(sz_b, seq_len, n_head, d_k)
    kk = jnp.transpose(kk, (2, 0, 1, 3)).reshape(-1, seq_len, d_k)      # (H*B, S, d_k)
    vv = jnp.stack(jnp.split(v, n_head, axis=-1)).reshape(n_head * sz_b, seq_len, -1)
    attn = jnp.einsum('bd,bsd->bs', qq, kk) / math.sqrt(float(d_k))
    attn = jax.nn.softmax(attn, axis=-1)
    out = jnp.einsum('bs,bsj->bj', attn, vv)
    return (out.reshape(n_head, sz_b, d_in // n_head),
            attn.reshape(n_head, sz_b, seq_len))


if __name__ == "__main__":
    # Small shapes consistent with the module.
    n_head, d_k, d_in = 4, 16, 32
    sz_b, seq_len = 2, 8

    key = jax.random.PRNGKey(0)
    k_q, k_w, k_b, k_in_q, k_in_k, k_in_v = jax.random.split(key, 6)

    # Deterministic parameter init mirroring the module's __init__.
    std = math.sqrt(2.0 / d_k)
    Q = (jax.random.normal(k_q, (n_head, d_k)) * std).astype(jnp.float32)
    Wk_torch = (jax.random.normal(k_w, (n_head * d_k, d_in)) * std).astype(jnp.float32)
    Wk = Wk_torch.T                                   # (d_in, n_head*d_k)
    bound = 1.0 / math.sqrt(d_in)                     # torch Linear default bias init
    bk = jax.random.uniform(k_b, (n_head * d_k,),
                            minval=-bound, maxval=bound).astype(jnp.float32)
    params = {"Q": Q, "Wk": Wk, "bk": bk}

    # Example inputs (q/k provided to mirror the signature; only q's shape and v matter).
    q_in = jax.random.normal(k_in_q, (sz_b, seq_len, d_in), dtype=jnp.float32)
    k_in = jax.random.normal(k_in_k, (sz_b, seq_len, d_in), dtype=jnp.float32)
    v_in = jax.random.normal(k_in_v, (sz_b, seq_len, d_in), dtype=jnp.float32)

    out, attn = multi_head_attention_mq(q_in, k_in, v_in, params,
                                        n_head=n_head, d_k=d_k)
    out, attn = jax.block_until_ready((out, attn))

    ref_out, ref_attn = _reference_forward(q_in, k_in, v_in, params,
                                           n_head=n_head, d_k=d_k)
    # Exact f32 math in the kernel; only the (mathematically equivalent)
    # parameter folding changes summation order, so tolerances can be tight.
    np.testing.assert_allclose(np.asarray(out), np.asarray(ref_out),
                               rtol=2e-4, atol=2e-5)
    np.testing.assert_allclose(np.asarray(attn), np.asarray(ref_attn),
                               rtol=2e-4, atol=2e-5)

    print("KERNEL_OK")
</pallas_src>

<mosaic_0001>
module attributes {stable_mosaic.version = 11 : i64} {
  func.func @_mha_mq_kernel(%arg0: i32, %arg1: memref<1x8x32xf32, #tpu.memory_space<vmem>>, %arg2: memref<32x4xf32, #tpu.memory_space<vmem>>, %arg3: memref<1x4xf32, #tpu.memory_space<vmem>>, %arg4: memref<4x32xf32, #tpu.memory_space<vmem>>, %arg5: memref<1x1x32xf32, #tpu.memory_space<vmem>>, %arg6: memref<1x4x8xf32, #tpu.memory_space<vmem>>) attributes {dimension_semantics = [#tpu.dimension_semantics<parallel>], iteration_bounds = array<i64: 2>, scalar_prefetch = 0 : i64, scratch_operands = 0 : i64, tpu.core_type = #tpu.core_type<tc>, window_params = [{transform_indices = @transform_0, window_bounds = array<i64: 1, 8, 32>}, {pipeline_mode = #tpu.pipeline_mode<synchronous>, transform_indices = @transform_1, window_bounds = array<i64: 32, 4>}, {pipeline_mode = #tpu.pipeline_mode<synchronous>, transform_indices = @transform_2, window_bounds = array<i64: 1, 4>}, {pipeline_mode = #tpu.pipeline_mode<synchronous>, transform_indices = @transform_3, window_bounds = array<i64: 4, 32>}, {transform_indices = @transform_4, window_bounds = array<i64: 1, 1, 32>}, {transform_indices = @transform_5, window_bounds = array<i64: 1, 4, 8>}]} {
    %c0 = arith.constant 0 : index
    %c0_0 = arith.constant 0 : index
    %c0_1 = arith.constant 0 : index
    %0 = vector.load %arg1[%c0, %c0_0, %c0_1] : memref<1x8x32xf32, #tpu.memory_space<vmem>>, vector<1x8x32xf32>
    %1 = vector.shape_cast %0 : vector<1x8x32xf32> to vector<8x32xf32>
    %c0_2 = arith.constant 0 : index
    %c0_3 = arith.constant 0 : index
    %2 = vector.load %arg2[%c0_2, %c0_3] : memref<32x4xf32, #tpu.memory_space<vmem>>, vector<32x4xf32>
    %cst = arith.constant dense<0.000000e+00> : vector<8x4xf32>
    %3 = tpu.matmul %1, %2, %cst {dimension_numbers = #tpu.dot_dimension_numbers<[1], [0], [0], [1], [0, 0, 1, 1], [], []>} : vector<8x32xf32>, vector<32x4xf32>, vector<8x4xf32> -> vector<8x4xf32>
    %c0_4 = arith.constant 0 : index
    %c0_5 = arith.constant 0 : index
    %4 = vector.load %arg3[%c0_4, %c0_5] : memref<1x4xf32, #tpu.memory_space<vmem>>, vector<1x4xf32>
    %5 = vector.broadcast %4 : vector<1x4xf32> to vector<8x4xf32>
    %6 = arith.addf %3, %5 : vector<8x4xf32>
    %7 = vector.shape_cast %6 : vector<8x4xf32> to vector<1x8x4xf32>
    %cst_6 = arith.constant dense<0xFF800000> : vector<1x4xf32>
    %8 = vector.multi_reduction <maximumf>, %7, %cst_6 [1] : vector<1x8x4xf32> to vector<1x4xf32>
    %9 = vector.shape_cast %8 : vector<1x4xf32> to vector<1x1x4xf32>
    %10 = vector.broadcast %9 : vector<1x1x4xf32> to vector<1x8x4xf32>
    %11 = arith.subf %7, %10 : vector<1x8x4xf32>
    %12 = math.exp %11 : vector<1x8x4xf32>
    %cst_7 = arith.constant dense<0.000000e+00> : vector<1x4xf32>
    %13 = vector.multi_reduction <add>, %12, %cst_7 [1] : vector<1x8x4xf32> to vector<1x4xf32>
    %14 = vector.shape_cast %13 : vector<1x4xf32> to vector<1x1x4xf32>
    %15 = vector.broadcast %14 : vector<1x1x4xf32> to vector<1x8x4xf32>
    %16 = arith.divf %12, %15 : vector<1x8x4xf32>
    %17 = vector.shape_cast %16 : vector<1x8x4xf32> to vector<8x4xf32>
    %18 = tpu.transpose %17, [1, 0] : vector<8x4xf32> -> vector<4x8xf32>
    %c0_8 = arith.constant 0 : index
    %c0_9 = arith.constant 0 : index
    %c0_10 = arith.constant 0 : index
    %19 = vector.load %arg6[%c0_8, %c0_9, %c0_10] : memref<1x4x8xf32, #tpu.memory_space<vmem>>, vector<1x4x8xf32>
    %20 = vector.shape_cast %19 : vector<1x4x8xf32> to vector<4x8xf32>
    %21 = vector.shape_cast %18 : vector<4x8xf32> to vector<1x4x8xf32>
    tpu.vector_store %arg6[%c0_8, %c0_9, %c0_10], %21 {strides = array<i32>} : memref<1x4x8xf32, #tpu.memory_space<vmem>>, vector<1x4x8xf32>,
    %c0_11 = arith.constant 0 : index
    %c0_12 = arith.constant 0 : index
    %22 = vector.load %arg4[%c0_11, %c0_12] : memref<4x32xf32, #tpu.memory_space<vmem>>, vector<4x32xf32>
    %cst_13 = arith.constant dense<0.000000e+00> : vector<8x32xf32>
    %23 = tpu.matmul %17, %22, %cst_13 {dimension_numbers = #tpu.dot_dimension_numbers<[1], [0], [0], [1], [0, 0, 1, 1], [], []>} : vector<8x4xf32>, vector<4x32xf32>, vector<8x32xf32> -> vector<8x32xf32>
    %24 = arith.mulf %23, %1 : vector<8x32xf32>
    %25 = vector.shape_cast %24 : vector<8x32xf32> to vector<1x8x32xf32>
    %cst_14 = arith.constant dense<0.000000e+00> : vector<1x32xf32>
    %26 = vector.multi_reduction <add>, %25, %cst_14 [1] : vector<1x8x32xf32> to vector<1x32xf32>
    %c0_15 = arith.constant 0 : index
    %c0_16 = arith.constant 0 : index
    %c0_17 = arith.constant 0 : index
    %27 = vector.load %arg5[%c0_15, %c0_16, %c0_17] : memref<1x1x32xf32, #tpu.memory_space<vmem>>, vector<1x1x32xf32>
    %28 = vector.shape_cast %27 : vector<1x1x32xf32> to vector<1x32xf32>
    %29 = vector.shape_cast %26 : vector<1x32xf32> to vector<1x1x32xf32>
    tpu.vector_store %arg5[%c0_15, %c0_16, %c0_17], %29 {strides = array<i32>} : memref<1x1x32xf32, #tpu.memory_space<vmem>>, vector<1x1x32xf32>,
    return
  }
  func.func @transform_0(%arg0: i32) -> (i32, i32, i32) {
    %c0_i32 = arith.constant 0 : i32
    %c0_i32_0 = arith.constant 0 : i32
    %c0_i32_1 = arith.constant 0 : i32
    return %arg0, %c0_i32, %c0_i32_0 : i32, i32, i32
  }
  func.func @transform_1(%arg0: i32) -> (i32, i32) {
    %c0_i32 = arith.constant 0 : i32
    %c0_i32_0 = arith.constant 0 : i32
    %c0_i32_1 = arith.constant 0 : i32
    return %c0_i32, %c0_i32_0 : i32, i32
  }
  func.func @transform_2(%arg0: i32) -> (i32, i32) {
    %c0_i32 = arith.constant 0 : i32
    %c0_i32_0 = arith.constant 0 : i32
    %c0_i32_1 = arith.constant 0 : i32
    return %c0_i32, %c0_i32_0 : i32, i32
  }
  func.func @transform_3(%arg0: i32) -> (i32, i32) {
    %c0_i32 = arith.constant 0 : i32
    %c0_i32_0 = arith.constant 0 : i32
    %c0_i32_1 = arith.constant 0 : i32
    return %c0_i32, %c0_i32_0 : i32, i32
  }
  func.func @transform_4(%arg0: i32) -> (i32, i32, i32) {
    %c0_i32 = arith.constant 0 : i32
    %c0_i32_0 = arith.constant 0 : i32
    %c0_i32_1 = arith.constant 0 : i32
    return %arg0, %c0_i32, %c0_i32_0 : i32, i32, i32
  }
  func.func @transform_5(%arg0: i32) -> (i32, i32, i32) {
    %c0_i32 = arith.constant 0 : i32
    %c0_i32_0 = arith.constant 0 : i32
    %c0_i32_1 = arith.constant 0 : i32
    return %arg0, %c0_i32, %c0_i32_0 : i32, i32, i32
  }
}

</mosaic_0001>

<llo_original>
// kernel: tpu_custom_call.1
$region0: #{tpu_custom_call.1}
  #allocation0 [shape = 'u32[]', space=smem, size = 0x4, offset = 0x4, fixed_abs, tag = 'smem constant byte address 0x4 - core index']
  #allocation1 [shape = 'u32[144,128]{1,0:T(1,128)}', space=vmem, size = 0x12000, scoped, tag = 'internal scratch']
  %s0 = inlined_call_operand.vmem [shape: f32[2,8,32], index: 0, kind: input, shape index: {}]
  %s1 = inlined_call_operand.vmem [shape: f32[32,4], index: 1, kind: input, shape index: {}]
  %s2 = inlined_call_operand.vmem [shape: f32[1,4], index: 2, kind: input, shape index: {}]
  %s3 = inlined_call_operand.vmem [shape: f32[4,32], index: 3, kind: input, shape index: {}]
  %s4 = inlined_call_operand.hbm [shape: f32[2,1,32], index: 4, kind: output, shape index: {0}]
  %s5 = inlined_call_operand.hbm [shape: f32[2,4,8], index: 5, kind: output, shape index: {1}]
  %6 = xla_tuple %s4, %s5
  %s7 = sld [smem:[#allocation0]]
  $region57: #{tpu_custom_call.1} parent=0
    _
  %s9 = ssub.s32 1, %s7
  %s10 = scalar_select 0, %s9, %s7
  $region1: #{tpu_custom_call.1} parent=0
    #allocation2 [shape = 'u8[1024]{0}', space=vmem, size = 0x400, scoped, tag = 'output window, operand 0']
    #allocation3 [shape = 's32[2]{0}', space=sflag, size = 0x8, scoped, tag = 'scoped memory for tpu_custom_call.1']
    #allocation4 [shape = 'u8[4096]{0}', space=vmem, size = 0x1000, scoped, tag = 'output window, operand 1']
    #allocation5 [shape = 's32[2]{0}', space=sflag, size = 0x8, scoped, tag = 'scoped memory for tpu_custom_call.1']
    %11 = vsyncpa [#allocation3], 0
    %s12 = scalar_lea.sflag [#allocation3], 1
    %13 = vsyncpa %s12, 0
    %14 = vsyncpa [#allocation5], 0
    %s15 = scalar_lea.sflag [#allocation5], 1
    %16 = vsyncpa %s15, 0
    loop: start=0, step=1, limit=4
    $region2: #{tpu_custom_call.1} parent=1 // loop_pre_header
      _
    $region3: #{tpu_custom_call.1} parent=1 // loop_header
      %s18 = sphi 0, %s22
      %p19 = scmp.ge.s32.totalorder %s18, 4
      %s28 = sphi 0, %s30
      %s31 = sphi 0, %s28
      %s32 = sphi 0, %s31
      %s48 = sphi 0, %s32
      %s52 = sphi 0, %s52
      %s54 = sphi 0, %s52
      %s55 = sphi 0, %s54
      %s69 = sphi 0, %s55
      %s73 = sphi 0, %s73
      %s75 = sphi 0, %s73
      %s76 = sphi 0, %s75
      %s90 = sphi 0, %s76
      %s94 = sphi 0, %s94
      %s96 = sphi 0, %s94
      %s97 = sphi 0, %s96
      %s111 = sphi 0, %s97
      %s117 = sphi 0, %s119
      %s120 = sphi 0, %s117
      %s121 = sphi 0, %s120
      %s137 = sphi 0, %s121
      %s143 = sphi 0, %s145
      %s146 = sphi 0, %s143
      %s147 = sphi 0, %s146
      %s163 = sphi 0, %s147
    $region4: #{tpu_custom_call.1} parent=1 // loop_header_branch
      %21 = sbr.rel (%p19) target = $region8
    $region5: #{tpu_custom_call.1} parent=1 // loop_body
      %s23 = ssub.s32 %s18, 1
      %s24 = ssub.s32 %s18, 2
      %s25 = sadd.s32 %s18, 1
      %s26 = ssub.s32 %s18, %s25
      %p27 = scmp.eq.s32.totalorder %s26, 0
      %s29 = sadd.s32 %s28, 1
      %s30 = scalar_select %p27, %s28, %s29
      %p33 = pneg %p27
      %p34 = scmp.eq.s32.totalorder %s18, 1
      %p35 = por %p33, %p34
      %p36 = scmp.ne.s32.totalorder %s28, %s31
      %p37 = scmp.eq.s32.totalorder %s18, 0
      %p38 = por %p36, %p37
      %p39 = scmp.ne.s32.totalorder %s28, %s31
      %p40 = scmp.eq.s32.totalorder %s23, 1
      %p41 = por %p39, %p40
      %p42 = scmp.ne.s32.totalorder %s31, %s32
      %p43 = scmp.eq.s32.totalorder %s23, 0
      %p44 = por %p42, %p43
      %p45 = scmp.ne.s32.totalorder %s31, %s32
      %p46 = scmp.eq.s32.totalorder %s24, 1
      %p47 = por %p45, %p46
      %p49 = scmp.ne.s32.totalorder %s32, %s48
      %p50 = scmp.eq.s32.totalorder %s24, 0
      %p51 = por %p49, %p50
      %s53 = sadd.s32 %s52, 1
      %p56 = scmp.eq.s32.totalorder %s18, 1
      %p57 = scmp.ne.s32.totalorder %s52, %s54
      %p58 = scmp.eq.s32.totalorder %s18, 0
      %p59 = por %p57, %p58
      %p60 = scmp.ne.s32.totalorder %s52, %s54
      %p61 = scmp.eq.s32.totalorder %s23, 1
      %p62 = por %p60, %p61
      %p63 = scmp.ne.s32.totalorder %s54, %s55
      %p64 = scmp.eq.s32.totalorder %s23, 0
      %p65 = por %p63, %p64
      %p66 = scmp.ne.s32.totalorder %s54, %s55
      %p67 = scmp.eq.s32.totalorder %s24, 1
      %p68 = por %p66, %p67
      %p70 = scmp.ne.s32.totalorder %s55, %s69
      %p71 = scmp.eq.s32.totalorder %s24, 0
      %p72 = por %p70, %p71
      %s74 = sadd.s32 %s73, 1
      %p77 = scmp.eq.s32.totalorder %s18, 1
      %p78 = scmp.ne.s32.totalorder %s73, %s75
      %p79 = scmp.eq.s32.totalorder %s18, 0
      %p80 = por %p78, %p79
      %p81 = scmp.ne.s32.totalorder %s73, %s75
      %p82 = scmp.eq.s32.totalorder %s23, 1
      %p83 = por %p81, %p82
      %p84 = scmp.ne.s32.totalorder %s75, %s76
      %p85 = scmp.eq.s32.totalorder %s23, 0
      %p86 = por %p84, %p85
      %p87 = scmp.ne.s32.totalorder %s75, %s76
      %p88 = scmp.eq.s32.totalorder %s24, 1
      %p89 = por %p87, %p88
      %p91 = scmp.ne.s32.totalorder %s76, %s90
      %p92 = scmp.eq.s32.totalorder %s24, 0
      %p93 = por %p91, %p92
      %s95 = sadd.s32 %s94, 1
      %p98 = scmp.eq.s32.totalorder %s18, 1
      %p99 = scmp.ne.s32.totalorder %s94, %s96
      %p100 = scmp.eq.s32.totalorder %s18, 0
      %p101 = por %p99, %p100
      %p102 = scmp.ne.s32.totalorder %s94, %s96
      %p103 = scmp.eq.s32.totalorder %s23, 1
      %p104 = por %p102, %p103
      %p105 = scmp.ne.s32.totalorder %s96, %s97
      %p106 = scmp.eq.s32.totalorder %s23, 0
      %p107 = por %p105, %p106
      %p108 = scmp.ne.s32.totalorder %s96, %s97
      %p109 = scmp.eq.s32.totalorder %s24, 1
      %p110 = por %p108, %p109
      %p112 = scmp.ne.s32.totalorder %s97, %s111
      %p113 = scmp.eq.s32.totalorder %s24, 0
      %p114 = por %p112, %p113
      %s115 = ssub.s32 %s18, %s25
      %p116 = scmp.eq.s32.totalorder %s115, 0
      %s118 = sadd.s32 %s117, 1
      %s119 = scalar_select %p116, %s117, %s118
      %p122 = pneg %p116
      %p123 = scmp.eq.s32.totalorder %s18, 1
      %p124 = por %p122, %p123
      %p125 = scmp.ne.s32.totalorder %s117, %s120
      %p126 = scmp.eq.s32.totalorder %s18, 0
      %p127 = por %p125, %p126
      %p128 = scmp.ne.s32.totalorder %s117, %s120
      %p129 = scmp.eq.s32.totalorder %s23, 1
      %p130 = por %p128, %p129
      %p131 = scmp.ne.s32.totalorder %s120, %s121
      %p132 = scmp.eq.s32.totalorder %s23, 0
      %p133 = por %p131, %p132
      %p134 = scmp.ne.s32.totalorder %s120, %s121
      %p135 = scmp.eq.s32.totalorder %s24, 1
      %p136 = por %p134, %p135
      %p138 = scmp.ne.s32.totalorder %s121, %s137
      %p139 = scmp.eq.s32.totalorder %s24, 0
      %p140 = por %p138, %p139
      %s141 = ssub.s32 %s18, %s25
      %p142 = scmp.eq.s32.totalorder %s141, 0
      %s144 = sadd.s32 %s143, 1
      %s145 = scalar_select %p142, %s143, %s144
      %p148 = pneg %p142
      %p149 = scmp.eq.s32.totalorder %s18, 1
      %p150 = por %p148, %p149
      %p151 = scmp.ne.s32.totalorder %s143, %s146
      %p152 = scmp.eq.s32.totalorder %s18, 0
      %p153 = por %p151, %p152
      %p154 = scmp.ne.s32.totalorder %s143, %s146
      %p155 = scmp.eq.s32.totalorder %s23, 1
      %p156 = por %p154, %p155
      %p157 = scmp.ne.s32.totalorder %s146, %s147
      %p158 = scmp.eq.s32.totalorder %s23, 0
      %p159 = por %p157, %p158
      %p160 = scmp.ne.s32.totalorder %s146, %s147
      %p161 = scmp.eq.s32.totalorder %s24, 1
      %p162 = por %p160, %p161
      %p164 = scmp.ne.s32.totalorder %s147, %s163
      %p165 = scmp.eq.s32.totalorder %s24, 0
      %p166 = por %p164, %p165
      %p167 = scmp.le.s32.totalorder 1, %s18
      %p168 = scmp.lt.s32.totalorder %s18, 3
      %p169 = pnand %p167, %p168
      %p170 = pneg %p169
      // Predicated region
      $region9: #{tpu_custom_call.1} parent=5 // pred_check
        _
      $region10: #{tpu_custom_call.1} parent=5 // pred_check_branch
        %172 = sbr.rel (%p169) target = $region12
      $region11: #{tpu_custom_call.1} parent=5 // pred_region
        %s173 = ssub.s32 %s18, 1
        // Predicated region
        $region13: #{tpu_custom_call.1} parent=11 // pred_check
          %p174 = pneg %p65
        $region14: #{tpu_custom_call.1} parent=11 // pred_check_branch
          %176 = sbr.rel (%p174) target = $region16
        $region15: #{tpu_custom_call.1} parent=11 // pred_region
          _
        $region16: #{tpu_custom_call.1} parent=11 // pred_fallthru
          _
        // Predicated region
        $region17: #{tpu_custom_call.1} parent=11 // pred_check
          %p177 = pneg %p86
        $region18: #{tpu_custom_call.1} parent=11 // pred_check_branch
          %179 = sbr.rel (%p177) target = $region20
        $region19: #{tpu_custom_call.1} parent=11 // pred_region
          _
        $region20: #{tpu_custom_call.1} parent=11 // pred_fallthru
          _
        // Predicated region
        $region21: #{tpu_custom_call.1} parent=11 // pred_check
          %p180 = pneg %p107
        $region22: #{tpu_custom_call.1} parent=11 // pred_check_branch
          %182 = sbr.rel (%p180) target = $region24
        $region23: #{tpu_custom_call.1} parent=11 // pred_region
          _
        $region24: #{tpu_custom_call.1} parent=11 // pred_fallthru
          _
      $region12: #{tpu_custom_call.1} parent=5 // pred_fallthru
        _
      %p183 = scmp.lt.s32.totalorder %s18, 2
      // Predicated region
      $region25: #{tpu_custom_call.1} parent=5 // pred_check
        %p184 = pneg %p183
      $region26: #{tpu_custom_call.1} parent=5 // pred_check_branch
        %186 = sbr.rel (%p184) target = $region28
      $region27: #{tpu_custom_call.1} parent=5 // pred_region
        // Predicated region
        $region29: #{tpu_custom_call.1} parent=27 // pred_check
          %p187 = pneg %p38
        $region30: #{tpu_custom_call.1} parent=27 // pred_check_branch
          %189 = sbr.rel (%p187) target = $region32
        $region31: #{tpu_custom_call.1} parent=27 // pred_region
          %p190 = scmp.lt.s32.totalorder %s18, 1
          %s191 = scalar_select %p190, %s18, 1
          %s192 = smul.addr %s191, 8
          %s193 = scalar_lea.vmem %s0, %s192
        $region32: #{tpu_custom_call.1} parent=27 // pred_fallthru
          _
      $region28: #{tpu_custom_call.1} parent=5 // pred_fallthru
        _
      %p194 = scmp.le.s32.totalorder 1, %s18
      %p195 = scmp.lt.s32.totalorder %s18, 3
      %p196 = pnand %p194, %p195
      %p197 = pneg %p196
      // Predicated region
      $region33: #{tpu_custom_call.1} parent=5 // pred_check
        _
      $region34: #{tpu_custom_call.1} parent=5 // pred_check_branch
        %199 = sbr.rel (%p196) target = $region36
      $region35: #{tpu_custom_call.1} parent=5 // pred_region
        %s200 = ssub.s32 %s18, 1
        %p201 = scmp.lt.s32.totalorder %s23, 1
        %s202 = scalar_select %p201, %s23, 1
        %s203 = smul.addr %s202, 8
        %s204 = scalar_lea.vmem %s0, %s203
        %p205 = pneg %p44
        %p206 = pneg %p41
        %p207 = pneg %p65
        %p208 = pneg %p62
        %p209 = pneg %p86
        %p210 = pneg %p83
        %p211 = pneg %p107
        %p212 = pneg %p104
        %p213 = pneg %p133
        %p214 = pneg %p130
        %s215 = sand.u32 %s120, 1
        %s216 = scalar_lea.sflag [#allocation3], %s215
        %s217 = sand.u32 %s120, 1
        %s218 = scalar_lea.vmem [#allocation2], %s217
        %p219 = pneg %p159
        %p220 = pneg %p156
        %s221 = sand.u32 %s146, 1
        %s222 = scalar_lea.sflag [#allocation5], %s221
        %s223 = sand.u32 %s146, 1
        %s224 = smul.addr %s223, 4
        %s225 = scalar_lea.vmem [#allocation4], %s224
        %p226 = scmp.lt.s32.totalorder %s23, 1
        %s227 = scalar_select %p226, %s23, 1
        %s228 = smul.addr %s227, 8
        %s229 = scalar_lea.vmem %s0, %s228
        %v230 = vld [vmem:[%s229] sm:$0xff]
        %v231 = vld [vmem:[%s1] sm:$0xff]
        %v232 = vld [vmem:[%s1 + $0x8] sm:$0xff]
        %v233 = vld [vmem:[%s1 + $0x10] sm:$0xff]
        %v234 = vld [vmem:[%s1 + $0x18] sm:$0xff]
        %v235 = vld [vmem:[%s2] sm:$0x1]
        %v237 = vlaneseq
        %v238 = vshrl.u32 %v237, 7
        %v239 = vsub.s32 0, %v238
        %v240 = vrot.slane %v235, %v239
        %vm242 = vcmask 261120
        %v244 = vsel %vm242, %v230, 0
        %246 = vmatprep.subr.mxu0 0.0
        %247 = vmatpush1.msra.mxu0 %v231
        %248 = vmatprep.subr.mxu0 0.0
        %249 = vmatpush1.msra.mxu0 %v232
        %250 = vmatprep.subr.mxu0 0.0
        %251 = vmatpush1.msra.mxu0 %v233
        %252 = vmatprep.subr.mxu0 0.0
        %253 = vmatpush1.msra.mxu0 %v234
        %254 = vmatprep.subr.mxu0 0.0
        %255 = vmatpush1.msra.mxu0 0.0
        %256 = vmatprep.subr.mxu0 0.0
        %257 = vmatpush1.msra.mxu0 0.0
        %258 = vmatprep.subr.mxu0 0.0
        %259 = vmatpush1.msra.mxu0 0.0
        %260 = vmatprep.subr.mxu0 0.0
        %261 = vmatpush1.msra.mxu0 0.0
        %262 = vmatprep.subr.mxu0 0.0
        %263 = vmatpush1.msra.mxu0 0.0
        %264 = vmatprep.subr.mxu0 0.0
        %265 = vmatpush1.msra.mxu0 0.0
        %266 = vmatprep.subr.mxu0 0.0
        %267 = vmatpush1.msra.mxu0 0.0
        %268 = vmatprep.subr.mxu0 0.0
        %269 = vmatpush1.msra.mxu0 0.0
        %270 = vmatprep.subr.mxu0 0.0
        %271 = vmatpush1.msra.mxu0 0.0
        %272 = vmatprep.subr.mxu0 0.0
        %273 = vmatpush1.msra.mxu0 0.0
        %274 = vmatprep.subr.mxu0 0.0
        %275 = vmatpush1.msra.mxu0 0.0
        %276 = vmatprep.subr.mxu0 0.0
        %277 = vmatpush1.msra.mxu0 0.0
        %278 = vmatprep.subr.mxu0 0.0
        %279 = vmatpush1.msra.mxu0 0.0
        %280 = vmatprep.subr.mxu0 0.0
        %281 = vmatpush1.msra.mxu0 0.0
        %282 = vmatprep.subr.mxu0 0.0
        %283 = vmatpush1.msra.mxu0 0.0
        %284 = vmatprep.subr.mxu0 0.0
        %285 = vmatpush1.msra.mxu0 0.0
        %286 = vmatprep.subr.mxu0 0.0
        %287 = vmatpush1.msra.mxu0 0.0
        %288 = vmatprep.subr.mxu0 0.0
        %289 = vmatpush1.msra.mxu0 0.0
        %290 = vmatprep.subr.mxu0 0.0
        %291 = vmatpush1.msra.mxu0 0.0
        %292 = vmatprep.subr.mxu0 0.0
        %293 = vmatpush1.msra.mxu0 0.0
        %294 = vmatprep.subr.mxu0 0.0
        %295 = vmatpush1.msra.mxu0 0.0
        %296 = vmatprep.subr.mxu0 0.0
        %297 = vmatpush1.msra.mxu0 0.0
        %298 = vmatprep.subr.mxu0 0.0
        %299 = vmatpush1.msra.mxu0 0.0
        %300 = vmatprep.subr.mxu0 0.0
        %301 = vmatpush1.msra.mxu0 0.0
        %302 = vmatprep.subr.mxu0 0.0
        %303 = vmatpush1.msra.mxu0 0.0
        %304 = vmatprep.subr.mxu0 0.0
        %305 = vmatpush1.msra.mxu0 0.0
        %306 = vmatprep.subr.mxu0 0.0
        %307 = vmatpush1.msra.mxu0 0.0
        %308 = vmatprep.subr.mxu0 0.0
        %309 = vmatpush1.msra.mxu0 0.0
        %310 = vmatprep.mubr.f32.mxu0 0.0
        %311 = vmatmul.mubr.f32.gmra.mrb[0].mxu0 %v244
        %v312 = vpop.f32.mrb[0].mxu0
        %v313 = vadd.f32 %v240, %v312
        %v314 = vpop.f32.mrb[0].mxu0
        %315 = vdwg.mxu0
        %vm316 = vcmask 31744
        %v317 = vsel %vm316, %v313, -inf
        %v318 = vrot.slane %v317, 4
        %v319 = vmax.f32 %v317, %v318
        %v320 = vrot.slane %v319, 2
        %v321 = vmax.f32 %v319, %v320
        %v322 = vrot.slane %v321, 1
        %v323 = vmax.f32 %v321, %v322
        %v324 = vsub.f32 %v313, %v323
        %v325 = vmul.f32 %v324, 1.442695
        %v326 = vpow.pop %v325
        %v327 = vsel %vm316, %v326, 0.0
        %v328 = vrot.slane %v327, 4
        %v329 = vadd.f32 %v327, %v328
        %v330 = vrot.slane %v329, 2
        %v331 = vadd.f32 %v329, %v330
        %v332 = vrot.slane %v331, 1
        %v333 = vadd.f32 %v331, %v332
        %v334 = vrcp.pop %v333
        %v335 = vmul.f32 %v326, %v334
        %336 = vxpose.xlu0.b32.start [1/16] %v335, 128
        %337 = vxpose.xlu0.b32.cont [2/16] 0.0, 128
        %338 = vxpose.xlu0.b32.cont [3/16] 0.0, 128
        %339 = vxpose.xlu0.b32.cont [4/16] 0.0, 128
        %340 = vxpose.xlu0.b32.cont [5/16] 0.0, 128
        %341 = vxpose.xlu0.b32.cont [6/16] 0.0, 128
        %342 = vxpose.xlu0.b32.cont [7/16] 0.0, 128
        %343 = vxpose.xlu0.b32.cont [8/16] 0.0, 128
        %344 = vxpose.xlu0.b32.cont [9/16] 0.0, 128
        %345 = vxpose.xlu0.b32.cont [10/16] 0.0, 128
        %346 = vxpose.xlu0.b32.cont [11/16] 0.0, 128
        %347 = vxpose.xlu0.b32.cont [12/16] 0.0, 128
        %348 = vxpose.xlu0.b32.cont [13/16] 0.0, 128
        %349 = vxpose.xlu0.b32.cont [14/16] 0.0, 128
        %350 = vxpose.xlu0.b32.cont [15/16] 0.0, 128
        %351 = vxpose.xlu0.b32.end [16/16] 0.0, 128
        %v352 = vpop.trf.xlu0
        %v353 = vpop.trf.xlu0
        %v354 = vpop.trf.xlu0
        %v355 = vpop.trf.xlu0
        %v356 = vpop.trf.xlu0
        %v357 = vpop.trf.xlu0
        %v358 = vpop.trf.xlu0
        %v359 = vpop.trf.xlu0
        %v360 = vpop.trf.xlu0
        %v361 = vpop.trf.xlu0
        %v362 = vpop.trf.xlu0
        %v363 = vpop.trf.xlu0
        %v364 = vpop.trf.xlu0
        %v365 = vpop.trf.xlu0
        %v366 = vpop.trf.xlu0
        %v367 = vpop.trf.xlu0
        %vm368 = vcmask 60416
        %369 = vst.msk [vmem:[%s225] sm:$0xf] %vm368, %v352
        %v370 = vld [vmem:[%s3] sm:$0xf]
        %v372 = vsel %vm316, %v335, 0
        %vm374 = vcmask 1043456
        %v376 = vsel %vm374, %v370, 0
        %378 = vmatprep.subr.mxu0 0.0
        %379 = vmatpush1.msra.mxu0 %v376
        %380 = vmatprep.subr.mxu0 0.0
        %381 = vmatpush1.msra.mxu0 0.0
        %382 = vmatprep.subr.mxu0 0.0
        %383 = vmatpush1.msra.mxu0 0.0
        %384 = vmatprep.subr.mxu0 0.0
        %385 = vmatpush1.msra.mxu0 0.0
        %386 = vmatprep.subr.mxu0 0.0
        %387 = vmatpush1.msra.mxu0 0.0
        %388 = vmatprep.subr.mxu0 0.0
        %389 = vmatpush1.msra.mxu0 0.0
        %390 = vmatprep.subr.mxu0 0.0
        %391 = vmatpush1.msra.mxu0 0.0
        %392 = vmatprep.subr.mxu0 0.0
        %393 = vmatpush1.msra.mxu0 0.0
        %394 = vmatprep.subr.mxu0 0.0
        %395 = vmatpush1.msra.mxu0 0.0
        %396 = vmatprep.subr.mxu0 0.0
        %397 = vmatpush1.msra.mxu0 0.0
        %398 = vmatprep.subr.mxu0 0.0
        %399 = vmatpush1.msra.mxu0 0.0
        %400 = vmatprep.subr.mxu0 0.0
        %401 = vmatpush1.msra.mxu0 0.0
        %402 = vmatprep.subr.mxu0 0.0
        %403 = vmatpush1.msra.mxu0 0.0
        %404 = vmatprep.subr.mxu0 0.0
        %405 = vmatpush1.msra.mxu0 0.0
        %406 = vmatprep.subr.mxu0 0.0
        %407 = vmatpush1.msra.mxu0 0.0
        %408 = vmatprep.subr.mxu0 0.0
        %409 = vmatpush1.msra.mxu0 0.0
        %410 = vmatprep.subr.mxu0 0.0
        %411 = vmatpush1.msra.mxu0 0.0
        %412 = vmatprep.subr.mxu0 0.0
        %413 = vmatpush1.msra.mxu0 0.0
        %414 = vmatprep.subr.mxu0 0.0
        %415 = vmatpush1.msra.mxu0 0.0
        %416 = vmatprep.subr.mxu0 0.0
        %417 = vmatpush1.msra.mxu0 0.0
        %418 = vmatprep.subr.mxu0 0.0
        %419 = vmatpush1.msra.mxu0 0.0
        %420 = vmatprep.subr.mxu0 0.0
        %421 = vmatpush1.msra.mxu0 0.0
        %422 = vmatprep.subr.mxu0 0.0
        %423 = vmatpush1.msra.mxu0 0.0
        %424 = vmatprep.subr.mxu0 0.0
        %425 = vmatpush1.msra.mxu0 0.0
        %426 = vmatprep.subr.mxu0 0.0
        %427 = vmatpush1.msra.mxu0 0.0
        %428 = vmatprep.subr.mxu0 0.0
        %429 = vmatpush1.msra.mxu0 0.0
        %430 = vmatprep.subr.mxu0 0.0
        %431 = vmatpush1.msra.mxu0 0.0
        %432 = vmatprep.subr.mxu0 0.0
        %433 = vmatpush1.msra.mxu0 0.0
        %434 = vmatprep.subr.mxu0 0.0
        %435 = vmatpush1.msra.mxu0 0.0
        %436 = vmatprep.subr.mxu0 0.0
        %437 = vmatpush1.msra.mxu0 0.0
        %438 = vmatprep.subr.mxu0 0.0
        %439 = vmatpush1.msra.mxu0 0.0
        %440 = vmatprep.subr.mxu0 0.0
        %441 = vmatpush1.msra.mxu0 0.0
        %442 = vmatprep.mubr.f32.mxu0 0.0
        %443 = vmatmul.mubr.f32.gmra.mrb[0].mxu0 %v372
        %v444 = vpop.f32.mrb[0].mxu0
        %v445 = vadd.f32 0.0, %v444
        %v446 = vpop.f32.mrb[0].mxu0
        %447 = vdwg.mxu0
        %v448 = vmul.f32 %v445, %v230
        %v449 = vsel %vm242, %v448, 0.0
        %v450 = vrot.slane %v449, 4
        %v451 = vadd.f32 %v449, %v450
        %v452 = vrot.slane %v451, 2
        %v453 = vadd.f32 %v451, %v452
        %v454 = vrot.slane %v453, 1
        %v455 = vadd.f32 %v453, %v454
        %vm456 = vcmask 253952
        %457 = vst.msk [vmem:[%s218] sm:$0x1] %vm456, %v455
        %s458 = sand.u32 %s120, 1
        %s459 = scalar_lea.sflag [#allocation3], %s458
        %s460 = sand.u32 %s120, 1
        %s461 = scalar_lea.vmem [#allocation2], %s460
        %s462 = sand.u32 %s146, 1
        %s463 = scalar_lea.sflag [#allocation5], %s462
        %s464 = sand.u32 %s146, 1
        %s465 = smul.addr %s464, 4
        %s466 = scalar_lea.vmem [#allocation4], %s465
        // Predicated region
        $region37: #{tpu_custom_call.1} parent=35 // pred_check
          %p467 = pneg %p130
        $region38: #{tpu_custom_call.1} parent=35 // pred_check_branch
          %469 = sbr.rel (%p467) target = $region40
        $region39: #{tpu_custom_call.1} parent=35 // pred_region
          %s471 = ssub.s32 16, 16
          %472 = vsyncadd %s459, %s471
          %s473 = smul.addr %s23, 16
          %s474 = scalar_lea.hbm %s4, %s473
          %s476 = sshll.u32 %s461, 4
          %s477 = int_to_ptr.vmem [resolvable:$true] %s476
          %479 = dma.vmem_to_hbm [thread:$0]  %s477, 16, %s474, %s459
        $region40: #{tpu_custom_call.1} parent=35 // pred_fallthru
          _
        // Predicated region
        $region41: #{tpu_custom_call.1} parent=35 // pred_check
          %p480 = pneg %p156
        $region42: #{tpu_custom_call.1} parent=35 // pred_check_branch
          %482 = sbr.rel (%p480) target = $region44
        $region43: #{tpu_custom_call.1} parent=35 // pred_region
          %s484 = ssub.s32 64, 64
          %485 = vsyncadd %s463, %s484
          %s486 = smul.addr %s23, 64
          %s487 = scalar_lea.hbm %s5, %s486
          %s489 = sshll.u32 %s466, 4
          %s490 = int_to_ptr.vmem [resolvable:$true] %s489
          %492 = dma.vmem_to_hbm [thread:$0]  %s490, 64, %s487, %s463
        $region44: #{tpu_custom_call.1} parent=35 // pred_fallthru
          _
      $region36: #{tpu_custom_call.1} parent=5 // pred_fallthru
        _
      %p493 = scmp.le.s32.totalorder 2, %s18
      // Predicated region
      $region45: #{tpu_custom_call.1} parent=5 // pred_check
        %p494 = pneg %p493
      $region46: #{tpu_custom_call.1} parent=5 // pred_check_branch
        %496 = sbr.rel (%p494) target = $region48
      $region47: #{tpu_custom_call.1} parent=5 // pred_region
        %s497 = ssub.s32 %s18, 2
        // Predicated region
        $region49: #{tpu_custom_call.1} parent=47 // pred_check
          %p498 = pneg %p136
        $region50: #{tpu_custom_call.1} parent=47 // pred_check_branch
          %500 = sbr.rel (%p498) target = $region52
        $region51: #{tpu_custom_call.1} parent=47 // pred_region
          %s501 = sand.u32 %s121, 1
          %s502 = scalar_lea.sflag [#allocation3], %s501
          %s503 = sand.u32 %s121, 1
          %s504 = scalar_lea.vmem [#allocation2], %s503
          %505 = dma.done %s502, 16
        $region52: #{tpu_custom_call.1} parent=47 // pred_fallthru
          _
        // Predicated region
        $region53: #{tpu_custom_call.1} parent=47 // pred_check
          %p506 = pneg %p162
        $region54: #{tpu_custom_call.1} parent=47 // pred_check_branch
          %508 = sbr.rel (%p506) target = $region56
        $region55: #{tpu_custom_call.1} parent=47 // pred_region
          %s509 = sand.u32 %s147, 1
          %s510 = scalar_lea.sflag [#allocation5], %s509
          %s511 = sand.u32 %s147, 1
          %s512 = smul.addr %s511, 4
          %s513 = scalar_lea.vmem [#allocation4], %s512
          %514 = dma.done %s510, 64
        $region56: #{tpu_custom_call.1} parent=47 // pred_fallthru
          _
      $region48: #{tpu_custom_call.1} parent=5 // pred_fallthru
        _
    $region6: #{tpu_custom_call.1} parent=1 // loop_footer
      %s22 = sadd.s32 1, %s18
    $region7: #{tpu_custom_call.1} parent=1 // loop_footer_branch
      %17 = sbr.rel target = $region3
    $region8: #{tpu_custom_call.1} parent=1 // loop_exit
      _
    %515 = vsyncpa [#allocation3], 1
    %s516 = scalar_lea.sflag [#allocation3], 1
    %517 = vsyncpa %s516, 1
    %518 = vsyncpa [#allocation5], 1
    %s519 = scalar_lea.sflag [#allocation5], 1
    %520 = vsyncpa %s519, 1

</llo_original>
